<compile_context>
chip_gen: v6e
topology: v6e:2x2x1
jax: 0.10.0
libtpu: 0.0.40
codegen_flags: <defaults>
</compile_context>

<pallas_src>
from functools import partial

import numpy as np
import jax
import jax.numpy as jnp
from jax.experimental import pallas as pl
from jax.experimental.pallas import tpu as pltpu


MXU_DTYPE = jnp.bfloat16  # MXU operand dtype (accumulation is always f32)


# ---------------------------------------------------------------------------
# One-time parameter preparation (outside the forward path)
# ---------------------------------------------------------------------------
def _expand_conv_cols_stacked(w_np, b_np, w_in, w_out, stride, pad):
    """Conv weight (Cout,Cin,ks,ks) -> K-stacked column-Toeplitz matrix.

    W[kh*W_in*Cin + c*Cin + ci, j*Cout + co] = w[co, ci, kh, kw]  with c = j*stride+kw-pad
    (entries whose padded column falls outside [0, w_in) are absent = 0).  Pairs with an
    LHS whose row for output row i is the ks padded input rows (i*stride+kh) concatenated
    along lanes, giving the full conv as ONE matmul per layer.
    """
    cout, cin, ks, _ = w_np.shape
    K = w_in * cin
    W = np.zeros((ks * K, w_out * cout), np.float32)
    for kh in range(ks):
        for kw in range(ks):
            for j in range(w_out):
                c = j * stride + kw - pad
                if 0 <= c < w_in:
                    W[kh * K + c * cin: kh * K + (c + 1) * cin,
                      j * cout:(j + 1) * cout] += w_np[:, :, kh, kw].T
    bias_t = np.tile(b_np, w_out)  # (w_out*cout,)
    return W, bias_t


def prepare_params(raw, resolution, strides, mxu_dtype=MXU_DTYPE):
    """Build the kernel-ready (expanded) parameter set once."""
    h_in, w_in = int(resolution[0]), int(resolution[1])
    conv_w, conv_meta, bias_rows = [], [], []
    for li, (w, b) in enumerate(raw["conv"]):
        w_np = np.asarray(w, np.float32)
        b_np = np.asarray(b, np.float32)
        cout, cin, ks, _ = w_np.shape
        pad = ks // 2
        s = int(strides[li])
        h_out = (h_in - ks + 2 * pad) // s + 1
        w_out = (w_in - ks + 2 * pad) // s + 1
        W_st, bias_t = _expand_conv_cols_stacked(w_np, b_np, w_in, w_out, s, pad)
        conv_w.append(jnp.asarray(W_st, mxu_dtype))      # (ks*W_in*Cin, W_out*Cout)
        bias_rows.append(bias_t)
        conv_meta.append(dict(ks=int(ks), stride=s, pad=int(pad),
                              h_in=int(h_in), h_out=int(h_out),
                              k_in=int(w_in * cin), ncols=int(w_out * cout)))
        h_in, w_in = h_out, w_out

    c_last = int(np.asarray(raw["conv"][-1][0]).shape[0])
    G = int(w_in)                      # lane groups = final spatial width
    h_last = int(h_in)
    hd = raw["head"]
    out_size = int(np.asarray(hd["w1"]).shape[0])

    eye_g = np.eye(G, dtype=np.float32)
    aavg = np.kron(eye_g, np.full((c_last, c_last), 1.0 / c_last, np.float32))
    w1_bd = np.kron(eye_g, np.asarray(hd["w1"], np.float32).T)   # (G*c_last, G*out)
    w2_bd = np.kron(eye_g, np.asarray(hd["w2"], np.float32).T)   # (G*out,   G*out)
    whead = np.concatenate([w1_bd, w2_bd], axis=0)               # one stacked head weight

    bias_rows += [np.tile(np.asarray(hd["gamma"], np.float32), G),
                  np.tile(np.asarray(hd["beta"], np.float32), G),
                  np.tile(np.asarray(hd["b1"], np.float32), G),
                  np.tile(np.asarray(hd["b2"], np.float32), G)]
    maxw = max(r.shape[0] for r in bias_rows)
    biases = np.zeros((len(bias_rows), maxw), np.float32)
    for i, r in enumerate(bias_rows):
        biases[i, :r.shape[0]] = r

    params = dict(conv_w=conv_w,
                  aavg=jnp.asarray(aavg, jnp.float32),   # f32 LN-stats matmul (accuracy)
                  whead=jnp.asarray(whead, mxu_dtype),
                  biases=jnp.asarray(biases, jnp.float32))
    meta = dict(conv=conv_meta, G=G, c_last=c_last, out_size=out_size,
                h_last=h_last, a_w=G * c_last, y_w=G * out_size)
    return params, meta


def _pick_batch_block(B, h1):
    """Largest Bt <= 8 dividing B that keeps the grid length >= 2 (v7x megacore)
    and an 8-row-aligned input block.  Pass batch_block=B explicitly on 1-TC chips
    (v5e/v6e) to collapse to a single grid step."""
    best = 1
    for d in range(1, min(B, 8) + 1):
        if B % d:
            continue
        if (d * h1) % 8 and d != B:
            continue
        if B // d >= 2:
            best = d
    if (best * h1) % 8 and best != B:
        best = B
    return best if B > 1 else 1


# ---------------------------------------------------------------------------
# Fused forward (one pallas_call)
# ---------------------------------------------------------------------------
def cnn_encoder_forward(params, x_nchw, *, meta, batch_block=None):
    conv_w = params["conv_w"]
    n_conv = len(conv_w)
    cmeta = meta["conv"]
    h1 = cmeta[0]["h_out"]
    h_last, a_w, y_w = meta["h_last"], meta["a_w"], meta["y_w"]
    gc = meta["G"] * meta["c_last"]
    mxu_dt = conv_w[0].dtype

    B, C, H, W = x_nchw.shape
    m0 = cmeta[0]
    ks0, s0, p0 = m0["ks"], m0["stride"], m0["pad"]

    # ---- wrapper glue (layout only, zero FLOPs): NCHW -> (H, W*C) slab, zero-pad H,
    #      stack the ks row-windows of layer 0 along the contraction dim, cast to the
    #      MXU operand dtype.  This replaces both the old transpose-only prep and the
    #      in-kernel one-hot row-selection matmuls for layer 0.
    x2d = jnp.transpose(x_nchw, (0, 2, 3, 1)).reshape(B, H, W * C)
    xp = jnp.pad(x2d, ((0, 0), (p0, p0), (0, 0)))
    wins = [xp[:, kh: kh + s0 * (h1 - 1) + 1: s0, :] for kh in range(ks0)]
    x_sel = jnp.concatenate(wins, axis=-1).reshape(B * h1, ks0 * W * C).astype(mxu_dt)

    bt = _pick_batch_block(B, h1) if batch_block is None else int(batch_block)
    assert B % bt == 0, (B, bt)
    grid = (B // bt,)

    # ---- inputs + BlockSpecs (6 refs total) ----------------------------------
    flat_inputs = [x_sel]
    in_specs = [pl.BlockSpec((bt * h1, ks0 * W * C), lambda g: (g, 0))]
    for Wl in conv_w:
        flat_inputs.append(Wl)
        in_specs.append(pl.BlockSpec(Wl.shape, lambda g: (0, 0)))
    for name in ("aavg", "whead", "biases"):
        arr = params[name]
        flat_inputs.append(arr)
        in_specs.append(pl.BlockSpec(arr.shape, lambda g: (0, 0)))

    out_specs = pl.BlockSpec((bt, h_last, y_w), lambda g: (g, 0, 0))   # lane-dense (., ., 128)
    out_shape = jax.ShapeDtypeStruct((B, h_last, y_w), jnp.float32)

    # ---- scratch: per inner conv layer a padded-activation buffer + a K-stacked LHS
    #      buffer, plus one buffer for the fused LayerNorm stats LHS.
    scratch_shapes = []
    for li in range(n_conv - 1):
        nxt = cmeta[li + 1]
        hp = nxt["h_in"] + 2 * nxt["pad"]
        scratch_shapes.append(pltpu.VMEM((bt * hp, nxt["k_in"]), jnp.float32))
        scratch_shapes.append(pltpu.VMEM((bt * nxt["h_out"], nxt["ks"] * nxt["k_in"]),
                                         jnp.float32))
    scratch_shapes.append(pltpu.VMEM((2 * bt * h_last, a_w), jnp.float32))

    # ---- kernel ---------------------------------------------------------------
    def kernel(*refs):
        x_ref = refs[0]
        w_refs = refs[1:1 + n_conv]
        aavg_ref, whead_ref, bias_ref = refs[1 + n_conv:4 + n_conv]
        o_ref = refs[4 + n_conv]
        scr = refs[5 + n_conv:]
        ln_ref = scr[-1]

        lhs = x_ref[...]                                 # (bt*h1, ks*K0), already MXU dtype
        a = None
        for li in range(n_conv):
            cm = cmeta[li]
            # ONE K-stacked MXU matmul per conv layer (bias folded in right after).
            acc = jnp.dot(lhs, w_refs[li][...], preferred_element_type=jnp.float32)
            acc = acc + bias_ref[li:li + 1, :cm["ncols"]]
            if li == n_conv - 1:
                a = acc                                  # (bt*h_last, a_w) f32, no ReLU
                break
            acc = jnp.maximum(acc, 0.0)

            # Build next layer's K-stacked LHS without touching the MXU:
            #  1) store the activation into a zero-padded per-batch row buffer,
            #  2) strided `pl.ds` reads pick the stride-s row windows per kh,
            #  3) the windows land side by side (lane-aligned) in the LHS buffer.
            nxt = cmeta[li + 1]
            pad_ref, cat_ref = scr[2 * li], scr[2 * li + 1]
            hp = nxt["h_in"] + 2 * nxt["pad"]
            hin, hout = nxt["h_in"], nxt["h_out"]
            kk, ss, pp, kin = nxt["ks"], nxt["stride"], nxt["pad"], nxt["k_in"]
            zrow = jnp.zeros((pp, kin), jnp.float32) if pp > 0 else None
            for b in range(bt):
                if pp > 0:
                    pad_ref[b * hp: b * hp + pp, :] = zrow
                    pad_ref[b * hp + pp + hin:(b + 1) * hp, :] = zrow
                pad_ref[b * hp + pp: b * hp + pp + hin, :] = acc[b * hin:(b + 1) * hin, :]
            for b in range(bt):
                for kh in range(kk):
                    if ss == 1:
                        piece = pad_ref[pl.ds(b * hp + kh, hout), :]
                    else:
                        piece = pad_ref[pl.ds(b * hp + kh, hout, ss), :]
                    cat_ref[b * hout:(b + 1) * hout, kh * kin:(kh + 1) * kin] = piece
            lhs = cat_ref[...].astype(mxu_dt)

        # ---- head: fused LayerNorm stats (ONE matmul) -> block-diag Linear/ReLU/Linear
        rows = bt * h_last
        ln_ref[0:rows, :] = a
        ln_ref[rows:2 * rows, :] = a * a
        stats = jnp.dot(ln_ref[...], aavg_ref[...], preferred_element_type=jnp.float32)
        mean = stats[0:rows, :]
        var = stats[rows:2 * rows, :] - mean * mean      # E[x^2] - mean^2, f32
        gamma = bias_ref[n_conv:n_conv + 1, :a_w]
        beta = bias_ref[n_conv + 1:n_conv + 2, :a_w]
        bh1 = bias_ref[n_conv + 2:n_conv + 3, :y_w]
        bh2 = bias_ref[n_conv + 3:n_conv + 4, :y_w]
        xn = (a - mean) * jax.lax.rsqrt(var + 1e-5) * gamma + beta
        hmid = jnp.dot(xn.astype(mxu_dt), whead_ref[0:gc, :],
                       preferred_element_type=jnp.float32) + bh1
        hmid = jnp.maximum(hmid, 0.0)
        y = jnp.dot(hmid.astype(mxu_dt), whead_ref[gc:gc + y_w, :],
                    preferred_element_type=jnp.float32) + bh2
        y = y.astype(o_ref.dtype)
        for b in range(bt):
            o_ref[b] = y[b * h_last:(b + 1) * h_last, :]  # lane-dense (h_last, 128) store

    # ---- advisory cost estimate -----------------------------------------------
    flops = 0
    for cm in cmeta:
        flops += 2 * B * cm["h_out"] * (cm["ks"] * cm["k_in"]) * cm["ncols"]
    flops += 2 * (2 * B * h_last) * a_w * a_w          # fused LN stats matmul
    flops += 2 * B * h_last * a_w * y_w                # head w1
    flops += 2 * B * h_last * y_w * y_w                # head w2
    bytes_accessed = sum(int(np.prod(arr.shape)) * arr.dtype.itemsize for arr in flat_inputs)
    bytes_accessed += B * h_last * y_w * 4
    transcendentals = B * h_last * a_w

    out = pl.pallas_call(
        kernel,
        out_shape=out_shape,
        grid=grid,
        in_specs=in_specs,
        out_specs=out_specs,
        scratch_shapes=scratch_shapes,
        compiler_params=pltpu.CompilerParams(
            dimension_semantics=("parallel",),          # v7x: the 2 TCs split the grid
            vmem_limit_bytes=8 * 1024 * 1024,           # actual footprint << 1 MiB
        ),
        cost_estimate=pl.CostEstimate(
            flops=int(flops),
            transcendentals=int(transcendentals),
            bytes_accessed=int(bytes_accessed),
        ),
    )(*flat_inputs)

    # (B, h_last, G*out) -> (B, h_last*G, out): pure row-major reshape, no transpose.
    return out.reshape(B, h_last * meta["G"], meta["out_size"])


# ---------------------------------------------------------------------------
# Raw (PyTorch-layout) parameter init and a pure-JAX f32 reference
# ---------------------------------------------------------------------------
def init_raw_params(key, channels, ks, out_size):
    n_conv = len(channels) - 1
    keys = jax.random.split(key, 2 * n_conv + 4)
    conv = []
    ki = 0
    for i in range(n_conv):
        cin, cout = channels[i], channels[i + 1]
        fan_in = cin * ks * ks
        w = jax.random.normal(keys[ki], (cout, cin, ks, ks), jnp.float32) * (2.0 / fan_in) ** 0.5
        b = jax.random.normal(keys[ki + 1], (cout,), jnp.float32) * 0.01
        conv.append((w, b))
        ki += 2
    c_last = channels[-1]
    head = {
        "gamma": jnp.ones((c_last,), jnp.float32),
        "beta": jnp.zeros((c_last,), jnp.float32),
        "w1": jax.random.normal(keys[ki], (out_size, c_last), jnp.float32) * (2.0 / c_last) ** 0.5,
        "b1": jax.random.normal(keys[ki + 1], (out_size,), jnp.float32) * 0.01,
        "w2": jax.random.normal(keys[ki + 2], (out_size, out_size), jnp.float32) * (2.0 / out_size) ** 0.5,
        "b2": jax.random.normal(keys[ki + 3], (out_size,), jnp.float32) * 0.01,
    }
    return {"conv": conv, "head": head}


def reference_forward(raw, x, strides):
    """Plain-XLA f32 reference matching the PyTorch module semantics."""
    out = x
    n_conv = len(raw["conv"])
    for i, (w, b) in enumerate(raw["conv"]):
        pad_h, pad_w = w.shape[2] // 2, w.shape[3] // 2
        out = jax.lax.conv_general_dilated(
            out, w, window_strides=(strides[i], strides[i]),
            padding=((pad_h, pad_h), (pad_w, pad_w)),
            dimension_numbers=("NCHW", "OIHW", "NCHW"))
        out = out + b[None, :, None, None]
        if i != n_conv - 1:
            out = jnp.maximum(out, 0.0)
    B, C, H, W = out.shape
    tok = out.reshape(B, C, H * W).transpose(0, 2, 1)           # (B, H*W, C)
    h = raw["head"]
    mu = jnp.mean(tok, axis=-1, keepdims=True)
    var = jnp.mean((tok - mu) ** 2, axis=-1, keepdims=True)
    tn = (tok - mu) * jax.lax.rsqrt(var + 1e-5) * h["gamma"] + h["beta"]
    y = jnp.maximum(tn @ h["w1"].T + h["b1"], 0.0) @ h["w2"].T + h["b2"]
    return y


# ---------------------------------------------------------------------------
if __name__ == "__main__":
    channels = (3, 16, 32)
    ks = 3
    strides = (2, 2)
    resolution = (16, 16)
    out_size = 32
    batch = 2

    key = jax.random.PRNGKey(0)
    k_param, k_x = jax.random.split(key)

    raw = init_raw_params(k_param, channels, ks, out_size)
    prepared, meta = prepare_params(raw, resolution, strides)

    x = jax.random.normal(k_x, (batch, channels[0], resolution[0], resolution[1]), jnp.float32)

    fwd = jax.jit(partial(cnn_encoder_forward, meta=meta))
    out = jax.block_until_ready(fwd(prepared, x))

    assert out.shape == (batch, 4 * 4, out_size), out.shape
    assert bool(jnp.all(jnp.isfinite(out)))

    # Tolerance check vs plain-XLA f32 reference (bf16 MXU operands, f32 accumulation).
    ref = reference_forward(raw, x, strides)
    np.testing.assert_allclose(np.asarray(out), np.asarray(ref), rtol=0.1, atol=0.1)

    print("KERNEL_OK")
</pallas_src>

<mosaic_0001>
module attributes {stable_mosaic.version = 11 : i64} {
  func.func @kernel(%arg0: i32, %arg1: memref<8x144xbf16, #tpu.memory_space<vmem>>, %arg2: memref<144x128xbf16, #tpu.memory_space<vmem>>, %arg3: memref<384x128xbf16, #tpu.memory_space<vmem>>, %arg4: memref<128x128xf32, #tpu.memory_space<vmem>>, %arg5: memref<256x128xbf16, #tpu.memory_space<vmem>>, %arg6: memref<6x128xf32, #tpu.memory_space<vmem>>, %arg7: memref<1x4x128xf32, #tpu.memory_space<vmem>>, %arg8: memref<10x128xf32, #tpu.memory_space<vmem>>, %arg9: memref<4x384xf32, #tpu.memory_space<vmem>>, %arg10: memref<8x128xf32, #tpu.memory_space<vmem>>) attributes {dimension_semantics = [#tpu.dimension_semantics<parallel>], iteration_bounds = array<i64: 2>, scalar_prefetch = 0 : i64, scratch_operands = 3 : i64, tpu.core_type = #tpu.core_type<tc>, window_params = [{transform_indices = @transform_0, window_bounds = array<i64: 8, 144>}, {pipeline_mode = #tpu.pipeline_mode<synchronous>, transform_indices = @transform_1, window_bounds = array<i64: 144, 128>}, {pipeline_mode = #tpu.pipeline_mode<synchronous>, transform_indices = @transform_2, window_bounds = array<i64: 384, 128>}, {pipeline_mode = #tpu.pipeline_mode<synchronous>, transform_indices = @transform_3, window_bounds = array<i64: 128, 128>}, {pipeline_mode = #tpu.pipeline_mode<synchronous>, transform_indices = @transform_4, window_bounds = array<i64: 256, 128>}, {pipeline_mode = #tpu.pipeline_mode<synchronous>, transform_indices = @transform_5, window_bounds = array<i64: 6, 128>}, {transform_indices = @transform_6, window_bounds = array<i64: 1, 4, 128>}]} {
    %c0 = arith.constant 0 : index
    %c0_0 = arith.constant 0 : index
    %0 = vector.load %arg1[%c0, %c0_0] : memref<8x144xbf16, #tpu.memory_space<vmem>>, vector<8x144xbf16>
    %c0_1 = arith.constant 0 : index
    %c0_2 = arith.constant 0 : index
    %1 = vector.load %arg2[%c0_1, %c0_2] : memref<144x128xbf16, #tpu.memory_space<vmem>>, vector<144x128xbf16>
    %cst = arith.constant dense<0.000000e+00> : vector<8x128xf32>
    %2 = tpu.matmul %0, %1, %cst {dimension_numbers = #tpu.dot_dimension_numbers<[1], [0], [0], [1], [0, 0, 1, 1], [], []>} : vector<8x144xbf16>, vector<144x128xbf16>, vector<8x128xf32> -> vector<8x128xf32>
    %c0_3 = arith.constant 0 : index
    %c0_4 = arith.constant 0 : index
    %3 = vector.load %arg6[%c0_3, %c0_4] : memref<6x128xf32, #tpu.memory_space<vmem>>, vector<1x128xf32>
    %4 = vector.broadcast %3 : vector<1x128xf32> to vector<8x128xf32>
    %5 = arith.addf %2, %4 : vector<8x128xf32>
    %cst_5 = arith.constant 0.000000e+00 : f32
    %6 = vector.broadcast %cst_5 : f32 to vector<8x128xf32>
    %7 = arith.maximumf %5, %6 : vector<8x128xf32>
    %cst_6 = arith.constant 0.000000e+00 : f32
    %8 = vector.broadcast %cst_6 : f32 to vector<1x128xf32>
    %c0_7 = arith.constant 0 : index
    %c0_8 = arith.constant 0 : index
    %9 = vector.load %arg8[%c0_7, %c0_8] : memref<10x128xf32, #tpu.memory_space<vmem>>, vector<1x128xf32>
    tpu.vector_store %arg8[%c0_7, %c0_8], %8 {strides = array<i32>} : memref<10x128xf32, #tpu.memory_space<vmem>>, vector<1x128xf32>,
    %c9 = arith.constant 9 : index
    %c0_9 = arith.constant 0 : index
    %10 = vector.load %arg8[%c9, %c0_9] : memref<10x128xf32, #tpu.memory_space<vmem>>, vector<1x128xf32>
    tpu.vector_store %arg8[%c9, %c0_9], %8 {strides = array<i32>} : memref<10x128xf32, #tpu.memory_space<vmem>>, vector<1x128xf32>,
    %c1 = arith.constant 1 : index
    %c0_10 = arith.constant 0 : index
    %11 = vector.load %arg8[%c1, %c0_10] : memref<10x128xf32, #tpu.memory_space<vmem>>, vector<8x128xf32>
    tpu.vector_store %arg8[%c1, %c0_10], %7 {strides = array<i32>} : memref<10x128xf32, #tpu.memory_space<vmem>>, vector<8x128xf32>,
    %c0_11 = arith.constant 0 : index
    %c0_12 = arith.constant 0 : index
    %12 = tpu.strided_load %arg8[%c0_11, %c0_12] {strides = array<i32: 2, 1>} : memref<10x128xf32, #tpu.memory_space<vmem>>, vector<4x128xf32>
    %c0_13 = arith.constant 0 : index
    %c0_14 = arith.constant 0 : index
    %13 = vector.load %arg9[%c0_13, %c0_14] : memref<4x384xf32, #tpu.memory_space<vmem>>, vector<4x128xf32>
    tpu.vector_store %arg9[%c0_13, %c0_14], %12 {strides = array<i32>} : memref<4x384xf32, #tpu.memory_space<vmem>>, vector<4x128xf32>,
    %c1_15 = arith.constant 1 : index
    %c0_16 = arith.constant 0 : index
    %14 = tpu.strided_load %arg8[%c1_15, %c0_16] {strides = array<i32: 2, 1>} : memref<10x128xf32, #tpu.memory_space<vmem>>, vector<4x128xf32>
    %c0_17 = arith.constant 0 : index
    %c128 = arith.constant 128 : index
    %15 = vector.load %arg9[%c0_17, %c128] : memref<4x384xf32, #tpu.memory_space<vmem>>, vector<4x128xf32>
    tpu.vector_store %arg9[%c0_17, %c128], %14 {strides = array<i32>} : memref<4x384xf32, #tpu.memory_space<vmem>>, vector<4x128xf32>,
    %c2 = arith.constant 2 : index
    %c0_18 = arith.constant 0 : index
    %16 = tpu.strided_load %arg8[%c2, %c0_18] {strides = array<i32: 2, 1>} : memref<10x128xf32, #tpu.memory_space<vmem>>, vector<4x128xf32>
    %c0_19 = arith.constant 0 : index
    %c256 = arith.constant 256 : index
    %17 = vector.load %arg9[%c0_19, %c256] : memref<4x384xf32, #tpu.memory_space<vmem>>, vector<4x128xf32>
    tpu.vector_store %arg9[%c0_19, %c256], %16 {strides = array<i32>} : memref<4x384xf32, #tpu.memory_space<vmem>>, vector<4x128xf32>,
    %c0_20 = arith.constant 0 : index
    %c0_21 = arith.constant 0 : index
    %18 = vector.load %arg9[%c0_20, %c0_21] : memref<4x384xf32, #tpu.memory_space<vmem>>, vector<4x384xf32>
    %19 = arith.truncf %18 : vector<4x384xf32> to vector<4x384xbf16>
    %c0_22 = arith.constant 0 : index
    %c0_23 = arith.constant 0 : index
    %20 = vector.load %arg3[%c0_22, %c0_23] : memref<384x128xbf16, #tpu.memory_space<vmem>>, vector<384x128xbf16>
    %cst_24 = arith.constant dense<0.000000e+00> : vector<4x128xf32>
    %21 = tpu.matmul %19, %20, %cst_24 {dimension_numbers = #tpu.dot_dimension_numbers<[1], [0], [0], [1], [0, 0, 1, 1], [], []>} : vector<4x384xbf16>, vector<384x128xbf16>, vector<4x128xf32> -> vector<4x128xf32>
    %c1_25 = arith.constant 1 : index
    %c0_26 = arith.constant 0 : index
    %22 = vector.load %arg6[%c1_25, %c0_26] : memref<6x128xf32, #tpu.memory_space<vmem>>, vector<1x128xf32>
    %23 = vector.broadcast %22 : vector<1x128xf32> to vector<4x128xf32>
    %24 = arith.addf %21, %23 : vector<4x128xf32>
    %c0_27 = arith.constant 0 : index
    %c0_28 = arith.constant 0 : index
    %25 = vector.load %arg10[%c0_27, %c0_28] : memref<8x128xf32, #tpu.memory_space<vmem>>, vector<4x128xf32>
    tpu.vector_store %arg10[%c0_27, %c0_28], %24 {strides = array<i32>} : memref<8x128xf32, #tpu.memory_space<vmem>>, vector<4x128xf32>,
    %26 = arith.mulf %24, %24 : vector<4x128xf32>
    %c4 = arith.constant 4 : index
    %c0_29 = arith.constant 0 : index
    %27 = vector.load %arg10[%c4, %c0_29] : memref<8x128xf32, #tpu.memory_space<vmem>>, vector<4x128xf32>
    tpu.vector_store %arg10[%c4, %c0_29], %26 {strides = array<i32>} : memref<8x128xf32, #tpu.memory_space<vmem>>, vector<4x128xf32>,
    %c0_30 = arith.constant 0 : index
    %c0_31 = arith.constant 0 : index
    %28 = vector.load %arg10[%c0_30, %c0_31] : memref<8x128xf32, #tpu.memory_space<vmem>>, vector<8x128xf32>
    %c0_32 = arith.constant 0 : index
    %c0_33 = arith.constant 0 : index
    %29 = vector.load %arg4[%c0_32, %c0_33] : memref<128x128xf32, #tpu.memory_space<vmem>>, vector<128x128xf32>
    %cst_34 = arith.constant dense<0.000000e+00> : vector<8x128xf32>
    %30 = tpu.matmul %28, %29, %cst_34 {dimension_numbers = #tpu.dot_dimension_numbers<[1], [0], [0], [1], [0, 0, 1, 1], [], []>} : vector<8x128xf32>, vector<128x128xf32>, vector<8x128xf32> -> vector<8x128xf32>
    %31 = vector.extract_strided_slice %30 {offsets = [0, 0], sizes = [4, 128], strides = [1, 1]} : vector<8x128xf32> to vector<4x128xf32>
    %32 = vector.extract_strided_slice %30 {offsets = [4, 0], sizes = [4, 128], strides = [1, 1]} : vector<8x128xf32> to vector<4x128xf32>
    %33 = arith.mulf %31, %31 : vector<4x128xf32>
    %34 = arith.subf %32, %33 : vector<4x128xf32>
    %c2_35 = arith.constant 2 : index
    %c0_36 = arith.constant 0 : index
    %35 = vector.load %arg6[%c2_35, %c0_36] : memref<6x128xf32, #tpu.memory_space<vmem>>, vector<1x128xf32>
    %c3 = arith.constant 3 : index
    %c0_37 = arith.constant 0 : index
    %36 = vector.load %arg6[%c3, %c0_37] : memref<6x128xf32, #tpu.memory_space<vmem>>, vector<1x128xf32>
    %c4_38 = arith.constant 4 : index
    %c0_39 = arith.constant 0 : index
    %37 = vector.load %arg6[%c4_38, %c0_39] : memref<6x128xf32, #tpu.memory_space<vmem>>, vector<1x128xf32>
    %c5 = arith.constant 5 : index
    %c0_40 = arith.constant 0 : index
    %38 = vector.load %arg6[%c5, %c0_40] : memref<6x128xf32, #tpu.memory_space<vmem>>, vector<1x128xf32>
    %39 = arith.subf %24, %31 : vector<4x128xf32>
    %cst_41 = arith.constant 9.99999974E-6 : f32
    %40 = vector.broadcast %cst_41 : f32 to vector<4x128xf32>
    %41 = arith.addf %34, %40 : vector<4x128xf32>
    %42 = math.rsqrt %41 : vector<4x128xf32>
    %43 = arith.mulf %39, %42 : vector<4x128xf32>
    %44 = vector.broadcast %35 : vector<1x128xf32> to vector<4x128xf32>
    %45 = arith.mulf %43, %44 : vector<4x128xf32>
    %46 = vector.broadcast %36 : vector<1x128xf32> to vector<4x128xf32>
    %47 = arith.addf %45, %46 : vector<4x128xf32>
    %48 = arith.truncf %47 : vector<4x128xf32> to vector<4x128xbf16>
    %c0_42 = arith.constant 0 : index
    %c0_43 = arith.constant 0 : index
    %49 = vector.load %arg5[%c0_42, %c0_43] : memref<256x128xbf16, #tpu.memory_space<vmem>>, vector<128x128xbf16>
    %cst_44 = arith.constant dense<0.000000e+00> : vector<4x128xf32>
    %50 = tpu.matmul %48, %49, %cst_44 {dimension_numbers = #tpu.dot_dimension_numbers<[1], [0], [0], [1], [0, 0, 1, 1], [], []>} : vector<4x128xbf16>, vector<128x128xbf16>, vector<4x128xf32> -> vector<4x128xf32>
    %51 = vector.broadcast %37 : vector<1x128xf32> to vector<4x128xf32>
    %52 = arith.addf %50, %51 : vector<4x128xf32>
    %cst_45 = arith.constant 0.000000e+00 : f32
    %53 = vector.broadcast %cst_45 : f32 to vector<4x128xf32>
    %54 = arith.maximumf %52, %53 : vector<4x128xf32>
    %55 = arith.truncf %54 : vector<4x128xf32> to vector<4x128xbf16>
    %c128_46 = arith.constant 128 : index
    %c0_47 = arith.constant 0 : index
    %56 = vector.load %arg5[%c128_46, %c0_47] : memref<256x128xbf16, #tpu.memory_space<vmem>>, vector<128x128xbf16>
    %cst_48 = arith.constant dense<0.000000e+00> : vector<4x128xf32>
    %57 = tpu.matmul %55, %56, %cst_48 {dimension_numbers = #tpu.dot_dimension_numbers<[1], [0], [0], [1], [0, 0, 1, 1], [], []>} : vector<4x128xbf16>, vector<128x128xbf16>, vector<4x128xf32> -> vector<4x128xf32>
    %58 = vector.broadcast %38 : vector<1x128xf32> to vector<4x128xf32>
    %59 = arith.addf %57, %58 : vector<4x128xf32>
    %c0_49 = arith.constant 0 : index
    %c0_50 = arith.constant 0 : index
    %c0_51 = arith.constant 0 : index
    %60 = vector.load %arg7[%c0_49, %c0_50, %c0_51] : memref<1x4x128xf32, #tpu.memory_space<vmem>>, vector<1x4x128xf32>
    %61 = vector.shape_cast %60 : vector<1x4x128xf32> to vector<4x128xf32>
    %62 = vector.shape_cast %59 : vector<4x128xf32> to vector<1x4x128xf32>
    tpu.vector_store %arg7[%c0_49, %c0_50, %c0_51], %62 {strides = array<i32>} : memref<1x4x128xf32, #tpu.memory_space<vmem>>, vector<1x4x128xf32>,
    return
  }
  func.func @transform_0(%arg0: i32) -> (i32, i32) {
    %c0_i32 = arith.constant 0 : i32
    %c0_i32_0 = arith.constant 0 : i32
    return %arg0, %c0_i32 : i32, i32
  }
  func.func @transform_1(%arg0: i32) -> (i32, i32) {
    %c0_i32 = arith.constant 0 : i32
    %c0_i32_0 = arith.constant 0 : i32
    %c0_i32_1 = arith.constant 0 : i32
    return %c0_i32, %c0_i32_0 : i32, i32
  }
  func.func @transform_2(%arg0: i32) -> (i32, i32) {
    %c0_i32 = arith.constant 0 : i32
    %c0_i32_0 = arith.constant 0 : i32
    %c0_i32_1 = arith.constant 0 : i32
    return %c0_i32, %c0_i32_0 : i32, i32
  }
  func.func @transform_3(%arg0: i32) -> (i32, i32) {
    %c0_i32 = arith.constant 0 : i32
    %c0_i32_0 = arith.constant 0 : i32
    %c0_i32_1 = arith.constant 0 : i32
    return %c0_i32, %c0_i32_0 : i32, i32
  }
  func.func @transform_4(%arg0: i32) -> (i32, i32) {
    %c0_i32 = arith.constant 0 : i32
    %c0_i32_0 = arith.constant 0 : i32
    %c0_i32_1 = arith.constant 0 : i32
    return %c0_i32, %c0_i32_0 : i32, i32
  }
  func.func @transform_5(%arg0: i32) -> (i32, i32) {
    %c0_i32 = arith.constant 0 : i32
    %c0_i32_0 = arith.constant 0 : i32
    %c0_i32_1 = arith.constant 0 : i32
    return %c0_i32, %c0_i32_0 : i32, i32
  }
  func.func @transform_6(%arg0: i32) -> (i32, i32, i32) {
    %c0_i32 = arith.constant 0 : i32
    %c0_i32_0 = arith.constant 0 : i32
    %c0_i32_1 = arith.constant 0 : i32
    return %arg0, %c0_i32, %c0_i32_0 : i32, i32, i32
  }
}

</mosaic_0001>

<llo_original>
// kernel: cnn_encoder_forward.1
$region0: #{cnn_encoder_forward.1}
  #allocation0 [shape = 'u32[]', space=smem, size = 0x4, offset = 0x4, fixed_abs, tag = 'smem constant byte address 0x4 - core index']
  #allocation1 [shape = 'u32[144,128]{1,0:T(1,128)}', space=vmem, size = 0x12000, scoped, tag = 'internal scratch']
  #allocation2 [shape = 'f32[10,128]{1,0:T(8,128)}', space=vmem, size = 0x2000, scoped, tag = 'scratch operand']
  #allocation3 [shape = 'f32[4,384]{1,0:T(4,128)}', space=vmem, size = 0x1800, scoped, tag = 'scratch operand']
  #allocation4 [shape = 'f32[8,128]{1,0:T(8,128)}', space=vmem, size = 0x1000, scoped, tag = 'scratch operand']
  %s0 = inlined_call_operand.vmem [shape: bf16[16,144], index: 0, kind: input, shape index: {}]
  %s1 = inlined_call_operand.vmem [shape: bf16[144,128], index: 1, kind: input, shape index: {}]
  %s2 = inlined_call_operand.vmem [shape: bf16[384,128], index: 2, kind: input, shape index: {}]
  %s3 = inlined_call_operand.vmem [shape: f32[128,128], index: 3, kind: input, shape index: {}]
  %s4 = inlined_call_operand.vmem [shape: bf16[256,128], index: 4, kind: input, shape index: {}]
  %s5 = inlined_call_operand.vmem [shape: f32[6,128], index: 5, kind: input, shape index: {}]
  %s6 = inlined_call_operand.vmem [shape: f32[2,4,128], index: 6, kind: output, shape index: {}]
  %s7 = sld [smem:[#allocation0]]
  $region57: #{cnn_encoder_forward.1} parent=0
    _
  %s9 = ssub.s32 1, %s7
  %s10 = scalar_select 0, %s9, %s7
  loop: start=0, step=1, limit=4
  $region2: #{cnn_encoder_forward.1} parent=0 // loop_pre_header
    _
  $region3: #{cnn_encoder_forward.1} parent=0 // loop_header
    %s12 = sphi 0, %s16
    %p13 = scmp.ge.s32.totalorder %s12, 4
    %s22 = sphi 0, %s24
    %s25 = sphi 0, %s22
    %s26 = sphi 0, %s25
    %s42 = sphi 0, %s26
    %s46 = sphi 0, %s46
    %s48 = sphi 0, %s46
    %s49 = sphi 0, %s48
    %s63 = sphi 0, %s49
    %s67 = sphi 0, %s67
    %s69 = sphi 0, %s67
    %s70 = sphi 0, %s69
    %s84 = sphi 0, %s70
    %s88 = sphi 0, %s88
    %s90 = sphi 0, %s88
    %s91 = sphi 0, %s90
    %s105 = sphi 0, %s91
    %s109 = sphi 0, %s109
    %s111 = sphi 0, %s109
    %s112 = sphi 0, %s111
    %s126 = sphi 0, %s112
    %s130 = sphi 0, %s130
    %s132 = sphi 0, %s130
    %s133 = sphi 0, %s132
    %s147 = sphi 0, %s133
    %s153 = sphi 0, %s155
    %s156 = sphi 0, %s153
    %s157 = sphi 0, %s156
    %s173 = sphi 0, %s157
  $region4: #{cnn_encoder_forward.1} parent=0 // loop_header_branch
    %15 = sbr.rel (%p13) target = $region8
  $region5: #{cnn_encoder_forward.1} parent=0 // loop_body
    %s17 = ssub.s32 %s12, 1
    %s18 = ssub.s32 %s12, 2
    %s19 = sadd.s32 %s12, 1
    %s20 = ssub.s32 %s12, %s19
    %p21 = scmp.eq.s32.totalorder %s20, 0
    %s23 = sadd.s32 %s22, 1
    %s24 = scalar_select %p21, %s22, %s23
    %p27 = pneg %p21
    %p28 = scmp.eq.s32.totalorder %s12, 1
    %p29 = por %p27, %p28
    %p30 = scmp.ne.s32.totalorder %s22, %s25
    %p31 = scmp.eq.s32.totalorder %s12, 0
    %p32 = por %p30, %p31
    %p33 = scmp.ne.s32.totalorder %s22, %s25
    %p34 = scmp.eq.s32.totalorder %s17, 1
    %p35 = por %p33, %p34
    %p36 = scmp.ne.s32.totalorder %s25, %s26
    %p37 = scmp.eq.s32.totalorder %s17, 0
    %p38 = por %p36, %p37
    %p39 = scmp.ne.s32.totalorder %s25, %s26
    %p40 = scmp.eq.s32.totalorder %s18, 1
    %p41 = por %p39, %p40
    %p43 = scmp.ne.s32.totalorder %s26, %s42
    %p44 = scmp.eq.s32.totalorder %s18, 0
    %p45 = por %p43, %p44
    %s47 = sadd.s32 %s46, 1
    %p50 = scmp.eq.s32.totalorder %s12, 1
    %p51 = scmp.ne.s32.totalorder %s46, %s48
    %p52 = scmp.eq.s32.totalorder %s12, 0
    %p53 = por %p51, %p52
    %p54 = scmp.ne.s32.totalorder %s46, %s48
    %p55 = scmp.eq.s32.totalorder %s17, 1
    %p56 = por %p54, %p55
    %p57 = scmp.ne.s32.totalorder %s48, %s49
    %p58 = scmp.eq.s32.totalorder %s17, 0
    %p59 = por %p57, %p58
    %p60 = scmp.ne.s32.totalorder %s48, %s49
    %p61 = scmp.eq.s32.totalorder %s18, 1
    %p62 = por %p60, %p61
    %p64 = scmp.ne.s32.totalorder %s49, %s63
    %p65 = scmp.eq.s32.totalorder %s18, 0
    %p66 = por %p64, %p65
    %s68 = sadd.s32 %s67, 1
    %p71 = scmp.eq.s32.totalorder %s12, 1
    %p72 = scmp.ne.s32.totalorder %s67, %s69
    %p73 = scmp.eq.s32.totalorder %s12, 0
    %p74 = por %p72, %p73
    %p75 = scmp.ne.s32.totalorder %s67, %s69
    %p76 = scmp.eq.s32.totalorder %s17, 1
    %p77 = por %p75, %p76
    %p78 = scmp.ne.s32.totalorder %s69, %s70
    %p79 = scmp.eq.s32.totalorder %s17, 0
    %p80 = por %p78, %p79
    %p81 = scmp.ne.s32.totalorder %s69, %s70
    %p82 = scmp.eq.s32.totalorder %s18, 1
    %p83 = por %p81, %p82
    %p85 = scmp.ne.s32.totalorder %s70, %s84
    %p86 = scmp.eq.s32.totalorder %s18, 0
    %p87 = por %p85, %p86
    %s89 = sadd.s32 %s88, 1
    %p92 = scmp.eq.s32.totalorder %s12, 1
    %p93 = scmp.ne.s32.totalorder %s88, %s90
    %p94 = scmp.eq.s32.totalorder %s12, 0
    %p95 = por %p93, %p94
    %p96 = scmp.ne.s32.totalorder %s88, %s90
    %p97 = scmp.eq.s32.totalorder %s17, 1
    %p98 = por %p96, %p97
    %p99 = scmp.ne.s32.totalorder %s90, %s91
    %p100 = scmp.eq.s32.totalorder %s17, 0
    %p101 = por %p99, %p100
    %p102 = scmp.ne.s32.totalorder %s90, %s91
    %p103 = scmp.eq.s32.totalorder %s18, 1
    %p104 = por %p102, %p103
    %p106 = scmp.ne.s32.totalorder %s91, %s105
    %p107 = scmp.eq.s32.totalorder %s18, 0
    %p108 = por %p106, %p107
    %s110 = sadd.s32 %s109, 1
    %p113 = scmp.eq.s32.totalorder %s12, 1
    %p114 = scmp.ne.s32.totalorder %s109, %s111
    %p115 = scmp.eq.s32.totalorder %s12, 0
    %p116 = por %p114, %p115
    %p117 = scmp.ne.s32.totalorder %s109, %s111
    %p118 = scmp.eq.s32.totalorder %s17, 1
    %p119 = por %p117, %p118
    %p120 = scmp.ne.s32.totalorder %s111, %s112
    %p121 = scmp.eq.s32.totalorder %s17, 0
    %p122 = por %p120, %p121
    %p123 = scmp.ne.s32.totalorder %s111, %s112
    %p124 = scmp.eq.s32.totalorder %s18, 1
    %p125 = por %p123, %p124
    %p127 = scmp.ne.s32.totalorder %s112, %s126
    %p128 = scmp.eq.s32.totalorder %s18, 0
    %p129 = por %p127, %p128
    %s131 = sadd.s32 %s130, 1
    %p134 = scmp.eq.s32.totalorder %s12, 1
    %p135 = scmp.ne.s32.totalorder %s130, %s132
    %p136 = scmp.eq.s32.totalorder %s12, 0
    %p137 = por %p135, %p136
    %p138 = scmp.ne.s32.totalorder %s130, %s132
    %p139 = scmp.eq.s32.totalorder %s17, 1
    %p140 = por %p138, %p139
    %p141 = scmp.ne.s32.totalorder %s132, %s133
    %p142 = scmp.eq.s32.totalorder %s17, 0
    %p143 = por %p141, %p142
    %p144 = scmp.ne.s32.totalorder %s132, %s133
    %p145 = scmp.eq.s32.totalorder %s18, 1
    %p146 = por %p144, %p145
    %p148 = scmp.ne.s32.totalorder %s133, %s147
    %p149 = scmp.eq.s32.totalorder %s18, 0
    %p150 = por %p148, %p149
    %s151 = ssub.s32 %s12, %s19
    %p152 = scmp.eq.s32.totalorder %s151, 0
    %s154 = sadd.s32 %s153, 1
    %s155 = scalar_select %p152, %s153, %s154
    %p158 = pneg %p152
    %p159 = scmp.eq.s32.totalorder %s12, 1
    %p160 = por %p158, %p159
    %p161 = scmp.ne.s32.totalorder %s153, %s156
    %p162 = scmp.eq.s32.totalorder %s12, 0
    %p163 = por %p161, %p162
    %p164 = scmp.ne.s32.totalorder %s153, %s156
    %p165 = scmp.eq.s32.totalorder %s17, 1
    %p166 = por %p164, %p165
    %p167 = scmp.ne.s32.totalorder %s156, %s157
    %p168 = scmp.eq.s32.totalorder %s17, 0
    %p169 = por %p167, %p168
    %p170 = scmp.ne.s32.totalorder %s156, %s157
    %p171 = scmp.eq.s32.totalorder %s18, 1
    %p172 = por %p170, %p171
    %p174 = scmp.ne.s32.totalorder %s157, %s173
    %p175 = scmp.eq.s32.totalorder %s18, 0
    %p176 = por %p174, %p175
    %p177 = scmp.le.s32.totalorder 1, %s12
    %p178 = scmp.lt.s32.totalorder %s12, 3
    %p179 = pnand %p177, %p178
    %p180 = pneg %p179
    // Predicated region
    $region9: #{cnn_encoder_forward.1} parent=5 // pred_check
      _
    $region10: #{cnn_encoder_forward.1} parent=5 // pred_check_branch
      %182 = sbr.rel (%p179) target = $region12
    $region11: #{cnn_encoder_forward.1} parent=5 // pred_region
      %s183 = ssub.s32 %s12, 1
      // Predicated region
      $region13: #{cnn_encoder_forward.1} parent=11 // pred_check
        %p184 = pneg %p59
      $region14: #{cnn_encoder_forward.1} parent=11 // pred_check_branch
        %186 = sbr.rel (%p184) target = $region16
      $region15: #{cnn_encoder_forward.1} parent=11 // pred_region
        _
      $region16: #{cnn_encoder_forward.1} parent=11 // pred_fallthru
        _
      // Predicated region
      $region17: #{cnn_encoder_forward.1} parent=11 // pred_check
        %p187 = pneg %p80
      $region18: #{cnn_encoder_forward.1} parent=11 // pred_check_branch
        %189 = sbr.rel (%p187) target = $region20
      $region19: #{cnn_encoder_forward.1} parent=11 // pred_region
        _
      $region20: #{cnn_encoder_forward.1} parent=11 // pred_fallthru
        _
      // Predicated region
      $region21: #{cnn_encoder_forward.1} parent=11 // pred_check
        %p190 = pneg %p101
      $region22: #{cnn_encoder_forward.1} parent=11 // pred_check_branch
        %192 = sbr.rel (%p190) target = $region24
      $region23: #{cnn_encoder_forward.1} parent=11 // pred_region
        _
      $region24: #{cnn_encoder_forward.1} parent=11 // pred_fallthru
        _
      // Predicated region
      $region25: #{cnn_encoder_forward.1} parent=11 // pred_check
        %p193 = pneg %p122
      $region26: #{cnn_encoder_forward.1} parent=11 // pred_check_branch
        %195 = sbr.rel (%p193) target = $region28
      $region27: #{cnn_encoder_forward.1} parent=11 // pred_region
        _
      $region28: #{cnn_encoder_forward.1} parent=11 // pred_fallthru
        _
      // Predicated region
      $region29: #{cnn_encoder_forward.1} parent=11 // pred_check
        %p196 = pneg %p143
      $region30: #{cnn_encoder_forward.1} parent=11 // pred_check_branch
        %198 = sbr.rel (%p196) target = $region32
      $region31: #{cnn_encoder_forward.1} parent=11 // pred_region
        _
      $region32: #{cnn_encoder_forward.1} parent=11 // pred_fallthru
        _
    $region12: #{cnn_encoder_forward.1} parent=5 // pred_fallthru
      _
    %p199 = scmp.lt.s32.totalorder %s12, 2
    // Predicated region
    $region33: #{cnn_encoder_forward.1} parent=5 // pred_check
      %p200 = pneg %p199
    $region34: #{cnn_encoder_forward.1} parent=5 // pred_check_branch
      %202 = sbr.rel (%p200) target = $region36
    $region35: #{cnn_encoder_forward.1} parent=5 // pred_region
      // Predicated region
      $region37: #{cnn_encoder_forward.1} parent=35 // pred_check
        %p203 = pneg %p32
      $region38: #{cnn_encoder_forward.1} parent=35 // pred_check_branch
        %205 = sbr.rel (%p203) target = $region40
      $region39: #{cnn_encoder_forward.1} parent=35 // pred_region
        %p206 = scmp.lt.s32.totalorder %s12, 1
        %s207 = scalar_select %p206, %s12, 1
        %s208 = smul.addr %s207, 2
        %s209 = smul.addr %s208, 4
        %s210 = scalar_lea.vmem %s0, %s209
      $region40: #{cnn_encoder_forward.1} parent=35 // pred_fallthru
        _
    $region36: #{cnn_encoder_forward.1} parent=5 // pred_fallthru
      _
    %p211 = scmp.le.s32.totalorder 1, %s12
    %p212 = scmp.lt.s32.totalorder %s12, 3
    %p213 = pnand %p211, %p212
    %p214 = pneg %p213
    // Predicated region
    $region41: #{cnn_encoder_forward.1} parent=5 // pred_check
      _
    $region42: #{cnn_encoder_forward.1} parent=5 // pred_check_branch
      %216 = sbr.rel (%p213) target = $region44
    $region43: #{cnn_encoder_forward.1} parent=5 // pred_region
      %s217 = ssub.s32 %s12, 1
      %p218 = scmp.lt.s32.totalorder %s17, 1
      %s219 = scalar_select %p218, %s17, 1
      %s220 = smul.addr %s219, 2
      %s221 = smul.addr %s220, 4
      %s222 = scalar_lea.vmem %s0, %s221
      %p223 = pneg %p38
      %p224 = pneg %p35
      %p225 = pneg %p59
      %p226 = pneg %p56
      %p227 = pneg %p80
      %p228 = pneg %p77
      %p229 = pneg %p101
      %p230 = pneg %p98
      %p231 = pneg %p122
      %p232 = pneg %p119
      %p233 = pneg %p143
      %p234 = pneg %p140
      %p235 = pneg %p169
      %p236 = pneg %p166
      %p237 = scmp.lt.s32.totalorder %s17, 1
      %s238 = scalar_select %p237, %s17, 1
      %s239 = smul.addr %s238, 4
      %s240 = scalar_lea.vmem %s6, %s239
      %p241 = scmp.lt.s32.totalorder %s17, 1
      %s242 = scalar_select %p241, %s17, 1
      %s243 = smul.addr %s242, 2
      %s244 = smul.addr %s243, 4
      %s245 = scalar_lea.vmem %s0, %s244
      %p246 = scmp.lt.s32.totalorder %s17, 1
      %s247 = scalar_select %p246, %s17, 1
      %s248 = smul.addr %s247, 4
      %s249 = scalar_lea.vmem %s6, %s248
      %v251 = vld [vmem:[%s245] sm:$0xff]
      %v252 = vld [vmem:[%s1] sm:$0xf]
      %v253 = vld [vmem:[%s1 + $0x4] sm:$0xf]
      %v254 = vld [vmem:[%s1 + $0x8] sm:$0xf]
      %v255 = vld [vmem:[%s1 + $0xc] sm:$0xf]
      %v256 = vld [vmem:[%s1 + $0x10] sm:$0xf]
      %v257 = vld [vmem:[%s1 + $0x14] sm:$0xf]
      %v258 = vld [vmem:[%s1 + $0x18] sm:$0xf]
      %v259 = vld [vmem:[%s1 + $0x1c] sm:$0xf]
      %v260 = vld [vmem:[%s1 + $0x20] sm:$0xf]
      %v261 = vld [vmem:[%s1 + $0x24] sm:$0xf]
      %v262 = vld [vmem:[%s1 + $0x28] sm:$0xf]
      %v263 = vld [vmem:[%s1 + $0x2c] sm:$0xf]
      %v264 = vld [vmem:[%s1 + $0x30] sm:$0xf]
      %v265 = vld [vmem:[%s1 + $0x34] sm:$0xf]
      %v266 = vld [vmem:[%s1 + $0x38] sm:$0xf]
      %v267 = vld [vmem:[%s1 + $0x3c] sm:$0xf]
      %v268 = vld [vmem:[%s1 + $0x40] sm:$0xf]
      %v269 = vld [vmem:[%s1 + $0x44] sm:$0xf]
      %v270 = vld [vmem:[%s5] sm:$0x1]
      %v271 = vlaneseq
      %v272 = vshrl.u32 %v271, 7
      %v273 = vsub.s32 0, %v272
      %v274 = vrot.slane %v270, %v273
      %v276 = vunpack.c.l.b16 %v251
      %v277 = vunpack.c.h.b16 %v251
      %v278 = vpack.c.b16 %v276, %v276
      %v279 = vpack.c.b16 %v277, %v277
      %v299 = vunpack.c.l.b16 %v252
      %v300 = vunpack.c.l.b16 %v253
      %v301 = vunpack.c.l.b16 %v254
      %v302 = vunpack.c.l.b16 %v255
      %v303 = vunpack.c.l.b16 %v256
      %v304 = vunpack.c.l.b16 %v257
      %v305 = vunpack.c.l.b16 %v258
      %v306 = vunpack.c.l.b16 %v259
      %v307 = vunpack.c.l.b16 %v260
      %v308 = vunpack.c.l.b16 %v261
      %v309 = vunpack.c.l.b16 %v262
      %v310 = vunpack.c.l.b16 %v263
      %v311 = vunpack.c.l.b16 %v264
      %v312 = vunpack.c.l.b16 %v265
      %v313 = vunpack.c.l.b16 %v266
      %v314 = vunpack.c.l.b16 %v267
      %v315 = vunpack.c.l.b16 %v268
      %v316 = vunpack.c.l.b16 %v269
      %v317 = vpack.c.b16 %v300, %v299
      %v318 = vpack.c.b16 %v302, %v301
      %v319 = vpack.c.b16 %v304, %v303
      %v320 = vpack.c.b16 %v306, %v305
      %v321 = vpack.c.b16 %v308, %v307
      %v322 = vpack.c.b16 %v310, %v309
      %v323 = vpack.c.b16 %v312, %v311
      %v324 = vpack.c.b16 %v314, %v313
      %v325 = vpack.c.b16 %v316, %v315
      %vm335 = vcmask 130048
      %v337 = vsel %vm335, %v279, 0
      %339 = vmatprep.subr.bf16.mxu0 0
      %340 = vmatpush1.bf16.msra.mxu0 %v324
      %341 = vmatprep.subr.bf16.mxu0 0
      %342 = vmatpush1.bf16.msra.mxu0 %v323
      %343 = vmatprep.subr.bf16.mxu0 0
      %344 = vmatpush1.bf16.msra.mxu0 %v322
      %345 = vmatprep.subr.bf16.mxu0 0
      %346 = vmatpush1.bf16.msra.mxu0 %v321
      %347 = vmatprep.subr.bf16.mxu0 0
      %348 = vmatpush1.bf16.msra.mxu0 %v320
      %349 = vmatprep.subr.bf16.mxu0 0
      %350 = vmatpush1.bf16.msra.mxu0 %v319
      %351 = vmatprep.subr.bf16.mxu0 0
      %352 = vmatpush1.bf16.msra.mxu0 %v318
      %353 = vmatprep.subr.bf16.mxu0 0
      %354 = vmatpush1.bf16.msra.mxu0 %v317
      %355 = vmatprep.subr.bf16.mxu0 0
      %356 = vmatpush2.bf16.msra.mxu0 0
      %357 = vmatprep.subr.bf16.mxu0 0
      %358 = vmatpush2.bf16.msra.mxu0 0
      %359 = vmatprep.subr.bf16.mxu0 0
      %360 = vmatpush2.bf16.msra.mxu0 0
      %361 = vmatprep.subr.bf16.mxu0 0
      %362 = vmatpush2.bf16.msra.mxu0 0
      %363 = vmatprep.subr.bf16.mxu0 0
      %364 = vmatpush2.bf16.msra.mxu0 0
      %365 = vmatprep.subr.bf16.mxu0 0
      %366 = vmatpush2.bf16.msra.mxu0 0
      %367 = vmatprep.subr.bf16.mxu0 0
      %368 = vmatpush2.bf16.msra.mxu0 0
      %369 = vmatprep.subr.bf16.mxu0 0
      %370 = vmatpush2.bf16.msra.mxu0 %v325
      %371 = vmatprep.mubr.bf16.mxu0 %v337
      %372 = vmatmul.mubr.bf16.gmra.mxu0 %v278
      %v373 = vpop.f32.mrf.mxu0
      %v374 = vadd.f32 %v274, %v373
      %v375 = vpop.f32.mrf.mxu0
      %v376 = vpop.f32.mrf.mxu0
      %v377 = vpop.f32.mrf.mxu0
      %378 = vdwg.mxu0
      %v379 = vmax.f32 %v374, 0.0
      %380 = vst [vmem:[#allocation2] sm:$0x1] 0.0
      %381 = vst [vmem:[#allocation2 + $0x9] sm:$0x1] 0.0
      %382 = vst [vmem:[#allocation2 + $0x1] sm:$0xff] %v379
      %v383 = vld [vmem:[#allocation2] ss:$2 sm:$0xf]
      %384 = vst [vmem:[#allocation3] sm:$0xf] %v383
      %s385 = scalar_lea.vmem [#allocation2], 1
      %v386 = vld [vmem:[%s385] ss:$2 sm:$0xf]
      %387 = vst [vmem:[#allocation3 + $0x4] sm:$0xf] %v386
      %s388 = scalar_lea.vmem [#allocation2], 2
      %v389 = vld [vmem:[%s388] ss:$2 sm:$0xf]
      %390 = vst [vmem:[#allocation3 + $0x8] sm:$0xf] %v389
      %v391 = vld [vmem:[#allocation3] sm:$0xff]
      %v392 = vld [vmem:[#allocation3 + $0x8] sm:$0xf]
      %v394 = vcombine.high %v391, %v391
      %v396 = vpack.c.bf16 %v391, %v391
      %v397 = vpack.c.bf16 %v394, %v394
      %v398 = vpack.c.bf16 %v392, %v392
      %v399 = vld [vmem:[%s2] sm:$0xf]
      %v400 = vld [vmem:[%s2 + $0x4] sm:$0xf]
      %v401 = vld [vmem:[%s2 + $0x8] sm:$0xf]
      %v402 = vld [vmem:[%s2 + $0xc] sm:$0xf]
      %v403 = vld [vmem:[%s2 + $0x10] sm:$0xf]
      %v404 = vld [vmem:[%s2 + $0x14] sm:$0xf]
      %v405 = vld [vmem:[%s2 + $0x18] sm:$0xf]
      %v406 = vld [vmem:[%s2 + $0x1c] sm:$0xf]
      %v407 = vld [vmem:[%s2 + $0x20] sm:$0xf]
      %v408 = vld [vmem:[%s2 + $0x24] sm:$0xf]
      %v409 = vld [vmem:[%s2 + $0x28] sm:$0xf]
      %v410 = vld [vmem:[%s2 + $0x2c] sm:$0xf]
      %v411 = vld [vmem:[%s2 + $0x30] sm:$0xf]
      %v412 = vld [vmem:[%s2 + $0x34] sm:$0xf]
      %v413 = vld [vmem:[%s2 + $0x38] sm:$0xf]
      %v414 = vld [vmem:[%s2 + $0x3c] sm:$0xf]
      %v415 = vld [vmem:[%s2 + $0x40] sm:$0xf]
      %v416 = vld [vmem:[%s2 + $0x44] sm:$0xf]
      %v417 = vld [vmem:[%s2 + $0x48] sm:$0xf]
      %v418 = vld [vmem:[%s2 + $0x4c] sm:$0xf]
      %v419 = vld [vmem:[%s2 + $0x50] sm:$0xf]
      %v420 = vld [vmem:[%s2 + $0x54] sm:$0xf]
      %v421 = vld [vmem:[%s2 + $0x58] sm:$0xf]
      %v422 = vld [vmem:[%s2 + $0x5c] sm:$0xf]
      %v423 = vld [vmem:[%s2 + $0x60] sm:$0xf]
      %v424 = vld [vmem:[%s2 + $0x64] sm:$0xf]
      %v425 = vld [vmem:[%s2 + $0x68] sm:$0xf]
      %v426 = vld [vmem:[%s2 + $0x6c] sm:$0xf]
      %v427 = vld [vmem:[%s2 + $0x70] sm:$0xf]
      %v428 = vld [vmem:[%s2 + $0x74] sm:$0xf]
      %v429 = vld [vmem:[%s2 + $0x78] sm:$0xf]
      %v430 = vld [vmem:[%s2 + $0x7c] sm:$0xf]
      %v431 = vld [vmem:[%s2 + $0x80] sm:$0xf]
      %v432 = vld [vmem:[%s2 + $0x84] sm:$0xf]
      %v433 = vld [vmem:[%s2 + $0x88] sm:$0xf]
      %v434 = vld [vmem:[%s2 + $0x8c] sm:$0xf]
      %v435 = vld [vmem:[%s2 + $0x90] sm:$0xf]
      %v436 = vld [vmem:[%s2 + $0x94] sm:$0xf]
      %v437 = vld [vmem:[%s2 + $0x98] sm:$0xf]
      %v438 = vld [vmem:[%s2 + $0x9c] sm:$0xf]
      %v439 = vld [vmem:[%s2 + $0xa0] sm:$0xf]
      %v440 = vld [vmem:[%s2 + $0xa4] sm:$0xf]
      %v441 = vld [vmem:[%s2 + $0xa8] sm:$0xf]
      %v442 = vld [vmem:[%s2 + $0xac] sm:$0xf]
      %v443 = vld [vmem:[%s2 + $0xb0] sm:$0xf]
      %v444 = vld [vmem:[%s2 + $0xb4] sm:$0xf]
      %v445 = vld [vmem:[%s2 + $0xb8] sm:$0xf]
      %v446 = vld [vmem:[%s2 + $0xbc] sm:$0xf]
      %v447 = vld [vmem:[%s5 + $0x1] sm:$0x1]
      %v448 = vlaneseq
      %v449 = vshrl.u32 %v448, 7
      %v450 = vsub.s32 0, %v449
      %v451 = vrot.slane %v447, %v450
      %v500 = vunpack.c.l.b16 %v399
      %v501 = vunpack.c.l.b16 %v400
      %v502 = vunpack.c.l.b16 %v401
      %v503 = vunpack.c.l.b16 %v402
      %v504 = vunpack.c.l.b16 %v403
      %v505 = vunpack.c.l.b16 %v404
      %v506 = vunpack.c.l.b16 %v405
      %v507 = vunpack.c.l.b16 %v406
      %v508 = vunpack.c.l.b16 %v407
      %v509 = vunpack.c.l.b16 %v408
      %v510 = vunpack.c.l.b16 %v409
      %v511 = vunpack.c.l.b16 %v410
      %v512 = vunpack.c.l.b16 %v411
      %v513 = vunpack.c.l.b16 %v412
      %v514 = vunpack.c.l.b16 %v413
      %v515 = vunpack.c.l.b16 %v414
      %v516 = vunpack.c.l.b16 %v415
      %v517 = vunpack.c.l.b16 %v416
      %v518 = vunpack.c.l.b16 %v417
      %v519 = vunpack.c.l.b16 %v418
      %v520 = vunpack.c.l.b16 %v419
      %v521 = vunpack.c.l.b16 %v420
      %v522 = vunpack.c.l.b16 %v421
      %v523 = vunpack.c.l.b16 %v422
      %v524 = vunpack.c.l.b16 %v423
      %v525 = vunpack.c.l.b16 %v424
      %v526 = vunpack.c.l.b16 %v425
      %v527 = vunpack.c.l.b16 %v426
      %v528 = vunpack.c.l.b16 %v427
      %v529 = vunpack.c.l.b16 %v428
      %v530 = vunpack.c.l.b16 %v429
      %v531 = vunpack.c.l.b16 %v430
      %v532 = vunpack.c.l.b16 %v431
      %v533 = vunpack.c.l.b16 %v432
      %v534 = vunpack.c.l.b16 %v433
      %v535 = vunpack.c.l.b16 %v434
      %v536 = vunpack.c.l.b16 %v435
      %v537 = vunpack.c.l.b16 %v436
      %v538 = vunpack.c.l.b16 %v437
      %v539 = vunpack.c.l.b16 %v438
      %v540 = vunpack.c.l.b16 %v439
      %v541 = vunpack.c.l.b16 %v440
      %v542 = vunpack.c.l.b16 %v441
      %v543 = vunpack.c.l.b16 %v442
      %v544 = vunpack.c.l.b16 %v443
      %v545 = vunpack.c.l.b16 %v444
      %v546 = vunpack.c.l.b16 %v445
      %v547 = vunpack.c.l.b16 %v446
      %v548 = vpack.c.b16 %v501, %v500
      %v549 = vpack.c.b16 %v503, %v502
      %v550 = vpack.c.b16 %v505, %v504
      %v551 = vpack.c.b16 %v507, %v506
      %v552 = vpack.c.b16 %v509, %v508
      %v553 = vpack.c.b16 %v511, %v510
      %v554 = vpack.c.b16 %v513, %v512
      %v555 = vpack.c.b16 %v515, %v514
      %v556 = vpack.c.b16 %v517, %v516
      %v557 = vpack.c.b16 %v519, %v518
      %v558 = vpack.c.b16 %v521, %v520
      %v559 = vpack.c.b16 %v523, %v522
      %v560 = vpack.c.b16 %v525, %v524
      %v561 = vpack.c.b16 %v527, %v526
      %v562 = vpack.c.b16 %v529, %v528
      %v563 = vpack.c.b16 %v531, %v530
      %v564 = vpack.c.b16 %v533, %v532
      %v565 = vpack.c.b16 %v535, %v534
      %v566 = vpack.c.b16 %v537, %v536
      %v567 = vpack.c.b16 %v539, %v538
      %v568 = vpack.c.b16 %v541, %v540
      %v569 = vpack.c.b16 %v543, %v542
      %v570 = vpack.c.b16 %v545, %v544
      %v571 = vpack.c.b16 %v547, %v546
      %596 = vmatprep.subr.bf16.mxu0 0
      %597 = vmatpush1.bf16.msra.mxu0 %v555
      %598 = vmatprep.subr.bf16.mxu0 0
      %599 = vmatpush1.bf16.msra.mxu0 %v554
      %600 = vmatprep.subr.bf16.mxu0 0
      %601 = vmatpush1.bf16.msra.mxu0 %v553
      %602 = vmatprep.subr.bf16.mxu0 0
      %603 = vmatpush1.bf16.msra.mxu0 %v552
      %604 = vmatprep.subr.bf16.mxu0 0
      %605 = vmatpush1.bf16.msra.mxu0 %v551
      %606 = vmatprep.subr.bf16.mxu0 0
      %607 = vmatpush1.bf16.msra.mxu0 %v550
      %608 = vmatprep.subr.bf16.mxu0 0
      %609 = vmatpush1.bf16.msra.mxu0 %v549
      %610 = vmatprep.subr.bf16.mxu0 0
      %611 = vmatpush1.bf16.msra.mxu0 %v548
      %612 = vmatprep.subr.bf16.mxu0 0
      %613 = vmatpush2.bf16.msra.mxu0 %v563
      %614 = vmatprep.subr.bf16.mxu0 0
      %615 = vmatpush2.bf16.msra.mxu0 %v562
      %616 = vmatprep.subr.bf16.mxu0 0
      %617 = vmatpush2.bf16.msra.mxu0 %v561
      %618 = vmatprep.subr.bf16.mxu0 0
      %619 = vmatpush2.bf16.msra.mxu0 %v560
      %620 = vmatprep.subr.bf16.mxu0 0
      %621 = vmatpush2.bf16.msra.mxu0 %v559
      %622 = vmatprep.subr.bf16.mxu0 0
      %623 = vmatpush2.bf16.msra.mxu0 %v558
      %624 = vmatprep.subr.bf16.mxu0 0
      %625 = vmatpush2.bf16.msra.mxu0 %v557
      %626 = vmatprep.subr.bf16.mxu0 0
      %627 = vmatpush2.bf16.msra.mxu0 %v556
      %628 = vmatprep.mubr.bf16.mxu0 %v397
      %629 = vmatmul.mubr.bf16.gmra.mxu0 %v396
      %v630 = vpop.f32.mrf.mxu0
      %v631 = vadd.f32 %v451, %v630
      %v632 = vpop.f32.mrf.mxu0
      %v633 = vpop.f32.mrf.mxu0
      %v634 = vpop.f32.mrf.mxu0
      %635 = vdwg.mxu0
      %636 = vmatprep.subr.bf16.mxu0 0
      %637 = vmatpush1.bf16.msra.mxu0 %v571
      %638 = vmatprep.subr.bf16.mxu0 0
      %639 = vmatpush1.bf16.msra.mxu0 %v570
      %640 = vmatprep.subr.bf16.mxu0 0
      %641 = vmatpush1.bf16.msra.mxu0 %v569
      %642 = vmatprep.subr.bf16.mxu0 0
      %643 = vmatpush1.bf16.msra.mxu0 %v568
      %644 = vmatprep.subr.bf16.mxu0 0
      %645 = vmatpush1.bf16.msra.mxu0 %v567
      %646 = vmatprep.subr.bf16.mxu0 0
      %647 = vmatpush1.bf16.msra.mxu0 %v566
      %648 = vmatprep.subr.bf16.mxu0 0
      %649 = vmatpush1.bf16.msra.mxu0 %v565
      %650 = vmatprep.subr.bf16.mxu0 0
      %651 = vmatpush1.bf16.msra.mxu0 %v564
      %652 = vmatprep.subr.bf16.mxu0 0
      %653 = vmatpush2.bf16.msra.mxu0 0
      %654 = vmatprep.subr.bf16.mxu0 0
      %655 = vmatpush2.bf16.msra.mxu0 0
      %656 = vmatprep.subr.bf16.mxu0 0
      %657 = vmatpush2.bf16.msra.mxu0 0
      %658 = vmatprep.subr.bf16.mxu0 0
      %659 = vmatpush2.bf16.msra.mxu0 0
      %660 = vmatprep.subr.bf16.mxu0 0
      %661 = vmatpush2.bf16.msra.mxu0 0
      %662 = vmatprep.subr.bf16.mxu0 0
      %663 = vmatpush2.bf16.msra.mxu0 0
      %664 = vmatprep.subr.bf16.mxu0 0
      %665 = vmatpush2.bf16.msra.mxu0 0
      %666 = vmatprep.subr.bf16.mxu0 0
      %667 = vmatpush2.bf16.msra.mxu0 0
      %668 = vmatprep.mubr.bf16.mxu0 0
      %669 = vmatmul.mubr.bf16.gmra.mxu0 %v398
      %v670 = vpop.f32.mrf.mxu0
      %v671 = vadd.f32 %v631, %v670
      %v672 = vpop.f32.mrf.mxu0
      %v673 = vpop.f32.mrf.mxu0
      %v674 = vpop.f32.mrf.mxu0
      %675 = vdwg.mxu0
      %676 = vst [vmem:[#allocation4] sm:$0xf] %v671
      %v677 = vmul.f32 %v671, %v671
      %678 = vst [vmem:[#allocation4 + $0x4] sm:$0xf] %v677
      %v679 = vld [vmem:[#allocation4] sm:$0xff]
      %v680 = vld [vmem:[%s3] sm:$0xff]
      %v681 = vld [vmem:[%s3 + $0x8] sm:$0xff]
      %v682 = vld [vmem:[%s3 + $0x10] sm:$0xff]
      %v683 = vld [vmem:[%s3 + $0x18] sm:$0xff]
      %v684 = vld [vmem:[%s3 + $0x20] sm:$0xff]
      %v685 = vld [vmem:[%s3 + $0x28] sm:$0xff]
      %v686 = vld [vmem:[%s3 + $0x30] sm:$0xff]
      %v687 = vld [vmem:[%s3 + $0x38] sm:$0xff]
      %v688 = vld [vmem:[%s3 + $0x40] sm:$0xff]
      %v689 = vld [vmem:[%s3 + $0x48] sm:$0xff]
      %v690 = vld [vmem:[%s3 + $0x50] sm:$0xff]
      %v691 = vld [vmem:[%s3 + $0x58] sm:$0xff]
      %v692 = vld [vmem:[%s3 + $0x60] sm:$0xff]
      %v693 = vld [vmem:[%s3 + $0x68] sm:$0xff]
      %v694 = vld [vmem:[%s3 + $0x70] sm:$0xff]
      %v695 = vld [vmem:[%s3 + $0x78] sm:$0xff]
      %696 = vmatprep.subr.mxu0 0.0
      %697 = vmatpush1.msra.mxu0 %v695
      %698 = vmatprep.subr.mxu0 0.0
      %699 = vmatpush1.msra.mxu0 %v694
      %700 = vmatprep.subr.mxu0 0.0
      %701 = vmatpush1.msra.mxu0 %v693
      %702 = vmatprep.subr.mxu0 0.0
      %703 = vmatpush1.msra.mxu0 %v692
      %704 = vmatprep.subr.mxu0 0.0
      %705 = vmatpush1.msra.mxu0 %v691
      %706 = vmatprep.subr.mxu0 0.0
      %707 = vmatpush1.msra.mxu0 %v690
      %708 = vmatprep.subr.mxu0 0.0
      %709 = vmatpush1.msra.mxu0 %v689
      %710 = vmatprep.subr.mxu0 0.0
      %711 = vmatpush1.msra.mxu0 %v688
      %712 = vmatprep.subr.mxu0 0.0
      %713 = vmatpush1.msra.mxu0 %v687
      %714 = vmatprep.subr.mxu0 0.0
      %715 = vmatpush1.msra.mxu0 %v686
      %716 = vmatprep.subr.mxu0 0.0
      %717 = vmatpush1.msra.mxu0 %v685
      %718 = vmatprep.subr.mxu0 0.0
      %719 = vmatpush1.msra.mxu0 %v684
      %720 = vmatprep.subr.mxu0 0.0
      %721 = vmatpush1.msra.mxu0 %v683
      %722 = vmatprep.subr.mxu0 0.0
      %723 = vmatpush1.msra.mxu0 %v682
      %724 = vmatprep.subr.mxu0 0.0
      %725 = vmatpush1.msra.mxu0 %v681
      %726 = vmatprep.subr.mxu0 0.0
      %727 = vmatpush1.msra.mxu0 %v680
      %728 = vmatprep.subr.mxu0 0.0
      %729 = vmatpush2.msra.mxu0 0.0
      %730 = vmatprep.subr.mxu0 0.0
      %731 = vmatpush2.msra.mxu0 0.0
      %732 = vmatprep.subr.mxu0 0.0
      %733 = vmatpush2.msra.mxu0 0.0
      %734 = vmatprep.subr.mxu0 0.0
      %735 = vmatpush2.msra.mxu0 0.0
      %736 = vmatprep.subr.mxu0 0.0
      %737 = vmatpush2.msra.mxu0 0.0
      %738 = vmatprep.subr.mxu0 0.0
      %739 = vmatpush2.msra.mxu0 0.0
      %740 = vmatprep.subr.mxu0 0.0
      %741 = vmatpush2.msra.mxu0 0.0
      %742 = vmatprep.subr.mxu0 0.0
      %743 = vmatpush2.msra.mxu0 0.0
      %744 = vmatprep.subr.mxu0 0.0
      %745 = vmatpush2.msra.mxu0 0.0
      %746 = vmatprep.subr.mxu0 0.0
      %747 = vmatpush2.msra.mxu0 0.0
      %748 = vmatprep.subr.mxu0 0.0
      %749 = vmatpush2.msra.mxu0 0.0
      %750 = vmatprep.subr.mxu0 0.0
      %751 = vmatpush2.msra.mxu0 0.0
      %752 = vmatprep.subr.mxu0 0.0
      %753 = vmatpush2.msra.mxu0 0.0
      %754 = vmatprep.subr.mxu0 0.0
      %755 = vmatpush2.msra.mxu0 0.0
      %756 = vmatprep.subr.mxu0 0.0
      %757 = vmatpush2.msra.mxu0 0.0
      %758 = vmatprep.subr.mxu0 0.0
      %759 = vmatpush2.msra.mxu0 0.0
      %760 = vmatprep.mubr.f32.mxu0 0.0
      %761 = vmatmul.mubr.f32.gmra.mxu0 %v679
      %v762 = vpop.f32.mrf.mxu0
      %v763 = vadd.f32 0.0, %v762
      %v764 = vpop.f32.mrf.mxu0
      %765 = vdwg.mxu0
      %v766 = vmul.f32 %v763, %v763
      %v768 = vrot.slane %v766, 4
      %v770 = vsub.f32 %v763, %v768
      %v771 = vld [vmem:[%s5 + $0x2] sm:$0x1]
      %v772 = vld [vmem:[%s5 + $0x3] sm:$0x1]
      %v773 = vld [vmem:[%s5 + $0x4] sm:$0x1]
      %v774 = vld [vmem:[%s5 + $0x5] sm:$0x1]
      %v775 = vsub.f32 %v671, %v763
      %v776 = vadd.f32 %v770, 1e-05
      %v777 = vrsqrt.pop %v776
      %v779 = vrot.slane %v777, 4
      %v781 = vmul.f32 %v775, %v779
      %v782 = vlaneseq
      %v783 = vshrl.u32 %v782, 7
      %v784 = vsub.s32 0, %v783
      %v785 = vrot.slane %v771, %v784
      %v786 = vmul.f32 %v781, %v785
      %v787 = vlaneseq
      %v788 = vshrl.u32 %v787, 7
      %v789 = vsub.s32 0, %v788
      %v790 = vrot.slane %v772, %v789
      %v791 = vadd.f32 %v786, %v790
      %v792 = vpack.c.bf16 %v791, %v791
      %v793 = vld [vmem:[%s4] sm:$0xf]
      %v794 = vld [vmem:[%s4 + $0x4] sm:$0xf]
      %v795 = vld [vmem:[%s4 + $0x8] sm:$0xf]
      %v796 = vld [vmem:[%s4 + $0xc] sm:$0xf]
      %v797 = vld [vmem:[%s4 + $0x10] sm:$0xf]
      %v798 = vld [vmem:[%s4 + $0x14] sm:$0xf]
      %v799 = vld [vmem:[%s4 + $0x18] sm:$0xf]
      %v800 = vld [vmem:[%s4 + $0x1c] sm:$0xf]
      %v801 = vld [vmem:[%s4 + $0x20] sm:$0xf]
      %v802 = vld [vmem:[%s4 + $0x24] sm:$0xf]
      %v803 = vld [vmem:[%s4 + $0x28] sm:$0xf]
      %v804 = vld [vmem:[%s4 + $0x2c] sm:$0xf]
      %v805 = vld [vmem:[%s4 + $0x30] sm:$0xf]
      %v806 = vld [vmem:[%s4 + $0x34] sm:$0xf]
      %v807 = vld [vmem:[%s4 + $0x38] sm:$0xf]
      %v808 = vld [vmem:[%s4 + $0x3c] sm:$0xf]
      %v809 = vlaneseq
      %v810 = vshrl.u32 %v809, 7
      %v811 = vsub.s32 0, %v810
      %v812 = vrot.slane %v773, %v811
      %v829 = vunpack.c.l.b16 %v793
      %v830 = vunpack.c.l.b16 %v794
      %v831 = vunpack.c.l.b16 %v795
      %v832 = vunpack.c.l.b16 %v796
      %v833 = vunpack.c.l.b16 %v797
      %v834 = vunpack.c.l.b16 %v798
      %v835 = vunpack.c.l.b16 %v799
      %v836 = vunpack.c.l.b16 %v800
      %v837 = vunpack.c.l.b16 %v801
      %v838 = vunpack.c.l.b16 %v802
      %v839 = vunpack.c.l.b16 %v803
      %v840 = vunpack.c.l.b16 %v804
      %v841 = vunpack.c.l.b16 %v805
      %v842 = vunpack.c.l.b16 %v806
      %v843 = vunpack.c.l.b16 %v807
      %v844 = vunpack.c.l.b16 %v808
      %v845 = vpack.c.b16 %v830, %v829
      %v846 = vpack.c.b16 %v832, %v831
      %v847 = vpack.c.b16 %v834, %v833
      %v848 = vpack.c.b16 %v836, %v835
      %v849 = vpack.c.b16 %v838, %v837
      %v850 = vpack.c.b16 %v840, %v839
      %v851 = vpack.c.b16 %v842, %v841
      %v852 = vpack.c.b16 %v844, %v843
      %861 = vmatprep.subr.bf16.mxu0 0
      %862 = vmatpush1.bf16.msra.mxu0 %v852
      %863 = vmatprep.subr.bf16.mxu0 0
      %864 = vmatpush1.bf16.msra.mxu0 %v851
      %865 = vmatprep.subr.bf16.mxu0 0
      %866 = vmatpush1.bf16.msra.mxu0 %v850
      %867 = vmatprep.subr.bf16.mxu0 0
      %868 = vmatpush1.bf16.msra.mxu0 %v849
      %869 = vmatprep.subr.bf16.mxu0 0
      %870 = vmatpush1.bf16.msra.mxu0 %v848
      %871 = vmatprep.subr.bf16.mxu0 0
      %872 = vmatpush1.bf16.msra.mxu0 %v847
      %873 = vmatprep.subr.bf16.mxu0 0
      %874 = vmatpush1.bf16.msra.mxu0 %v846
      %875 = vmatprep.subr.bf16.mxu0 0
      %876 = vmatpush1.bf16.msra.mxu0 %v845
      %877 = vmatprep.subr.bf16.mxu0 0
      %878 = vmatpush2.bf16.msra.mxu0 0
      %879 = vmatprep.subr.bf16.mxu0 0
      %880 = vmatpush2.bf16.msra.mxu0 0
      %881 = vmatprep.subr.bf16.mxu0 0
      %882 = vmatpush2.bf16.msra.mxu0 0
      %883 = vmatprep.subr.bf16.mxu0 0
      %884 = vmatpush2.bf16.msra.mxu0 0
      %885 = vmatprep.subr.bf16.mxu0 0
      %886 = vmatpush2.bf16.msra.mxu0 0
      %887 = vmatprep.subr.bf16.mxu0 0
      %888 = vmatpush2.bf16.msra.mxu0 0
      %889 = vmatprep.subr.bf16.mxu0 0
      %890 = vmatpush2.bf16.msra.mxu0 0
      %891 = vmatprep.subr.bf16.mxu0 0
      %892 = vmatpush2.bf16.msra.mxu0 0
      %893 = vmatprep.mubr.bf16.mxu0 0
      %894 = vmatmul.mubr.bf16.gmra.mxu0 %v792
      %v895 = vpop.f32.mrf.mxu0
      %v896 = vadd.f32 %v812, %v895
      %v897 = vpop.f32.mrf.mxu0
      %v898 = vpop.f32.mrf.mxu0
      %v899 = vpop.f32.mrf.mxu0
      %900 = vdwg.mxu0
      %v901 = vmax.f32 %v896, 0.0
      %v902 = vpack.c.bf16 %v901, %v901
      %v903 = vld [vmem:[%s4 + $0x40] sm:$0xf]
      %v904 = vld [vmem:[%s4 + $0x44] sm:$0xf]
      %v905 = vld [vmem:[%s4 + $0x48] sm:$0xf]
      %v906 = vld [vmem:[%s4 + $0x4c] sm:$0xf]
      %v907 = vld [vmem:[%s4 + $0x50] sm:$0xf]
      %v908 = vld [vmem:[%s4 + $0x54] sm:$0xf]
      %v909 = vld [vmem:[%s4 + $0x58] sm:$0xf]
      %v910 = vld [vmem:[%s4 + $0x5c] sm:$0xf]
      %v911 = vld [vmem:[%s4 + $0x60] sm:$0xf]
      %v912 = vld [vmem:[%s4 + $0x64] sm:$0xf]
      %v913 = vld [vmem:[%s4 + $0x68] sm:$0xf]
      %v914 = vld [vmem:[%s4 + $0x6c] sm:$0xf]
      %v915 = vld [vmem:[%s4 + $0x70] sm:$0xf]
      %v916 = vld [vmem:[%s4 + $0x74] sm:$0xf]
      %v917 = vld [vmem:[%s4 + $0x78] sm:$0xf]
      %v918 = vld [vmem:[%s4 + $0x7c] sm:$0xf]
      %v919 = vlaneseq
      %v920 = vshrl.u32 %v919, 7
      %v921 = vsub.s32 0, %v920
      %v922 = vrot.slane %v774, %v921
      %v939 = vunpack.c.l.b16 %v903
      %v940 = vunpack.c.l.b16 %v904
      %v941 = vunpack.c.l.b16 %v905
      %v942 = vunpack.c.l.b16 %v906
      %v943 = vunpack.c.l.b16 %v907
      %v944 = vunpack.c.l.b16 %v908
      %v945 = vunpack.c.l.b16 %v909
      %v946 = vunpack.c.l.b16 %v910
      %v947 = vunpack.c.l.b16 %v911
      %v948 = vunpack.c.l.b16 %v912
      %v949 = vunpack.c.l.b16 %v913
      %v950 = vunpack.c.l.b16 %v914
      %v951 = vunpack.c.l.b16 %v915
      %v952 = vunpack.c.l.b16 %v916
      %v953 = vunpack.c.l.b16 %v917
      %v954 = vunpack.c.l.b16 %v918
      %v955 = vpack.c.b16 %v940, %v939
      %v956 = vpack.c.b16 %v942, %v941
      %v957 = vpack.c.b16 %v944, %v943
      %v958 = vpack.c.b16 %v946, %v945
      %v959 = vpack.c.b16 %v948, %v947
      %v960 = vpack.c.b16 %v950, %v949
      %v961 = vpack.c.b16 %v952, %v951
      %v962 = vpack.c.b16 %v954, %v953
      %971 = vmatprep.subr.bf16.mxu0 0
      %972 = vmatpush1.bf16.msra.mxu0 %v962
      %973 = vmatprep.subr.bf16.mxu0 0
      %974 = vmatpush1.bf16.msra.mxu0 %v961
      %975 = vmatprep.subr.bf16.mxu0 0
      %976 = vmatpush1.bf16.msra.mxu0 %v960
      %977 = vmatprep.subr.bf16.mxu0 0
      %978 = vmatpush1.bf16.msra.mxu0 %v959
      %979 = vmatprep.subr.bf16.mxu0 0
      %980 = vmatpush1.bf16.msra.mxu0 %v958
      %981 = vmatprep.subr.bf16.mxu0 0
      %982 = vmatpush1.bf16.msra.mxu0 %v957
      %983 = vmatprep.subr.bf16.mxu0 0
      %984 = vmatpush1.bf16.msra.mxu0 %v956
      %985 = vmatprep.subr.bf16.mxu0 0
      %986 = vmatpush1.bf16.msra.mxu0 %v955
      %987 = vmatprep.subr.bf16.mxu0 0
      %988 = vmatpush2.bf16.msra.mxu0 0
      %989 = vmatprep.subr.bf16.mxu0 0
      %990 = vmatpush2.bf16.msra.mxu0 0
      %991 = vmatprep.subr.bf16.mxu0 0
      %992 = vmatpush2.bf16.msra.mxu0 0
      %993 = vmatprep.subr.bf16.mxu0 0
      %994 = vmatpush2.bf16.msra.mxu0 0
      %995 = vmatprep.subr.bf16.mxu0 0
      %996 = vmatpush2.bf16.msra.mxu0 0
      %997 = vmatprep.subr.bf16.mxu0 0
      %998 = vmatpush2.bf16.msra.mxu0 0
      %999 = vmatprep.subr.bf16.mxu0 0
      %1000 = vmatpush2.bf16.msra.mxu0 0
      %1001 = vmatprep.subr.bf16.mxu0 0
      %1002 = vmatpush2.bf16.msra.mxu0 0
      %1003 = vmatprep.mubr.bf16.mxu0 0
      %1004 = vmatmul.mubr.bf16.gmra.mxu0 %v902
      %v1005 = vpop.f32.mrf.mxu0
      %v1006 = vadd.f32 %v922, %v1005
      %v1007 = vpop.f32.mrf.mxu0
      %v1008 = vpop.f32.mrf.mxu0
      %v1009 = vpop.f32.mrf.mxu0
      %1010 = vdwg.mxu0
      %1011 = vst [vmem:[%s249] sm:$0xf] %v1006
      %p1012 = scmp.lt.s32.totalorder %s17, 1
      %s1013 = scalar_select %p1012, %s17, 1
      %s1014 = smul.addr %s1013, 4
      %s1015 = scalar_lea.vmem %s6, %s1014
      // Predicated region
      $region45: #{cnn_encoder_forward.1} parent=43 // pred_check
        %p1016 = pneg %p166
      $region46: #{cnn_encoder_forward.1} parent=43 // pred_check_branch
        %1018 = sbr.rel (%p1016) target = $region48
      $region47: #{cnn_encoder_forward.1} parent=43 // pred_region
        _
      $region48: #{cnn_encoder_forward.1} parent=43 // pred_fallthru
        _
    $region44: #{cnn_encoder_forward.1} parent=5 // pred_fallthru
      _
    %p1019 = scmp.le.s32.totalorder 2, %s12
    // Predicated region
    $region49: #{cnn_encoder_forward.1} parent=5 // pred_check
      %p1020 = pneg %p1019
    $region50: #{cnn_encoder_forward.1} parent=5 // pred_check_branch
      %1022 = sbr.rel (%p1020) target = $region52
    $region51: #{cnn_encoder_forward.1} parent=5 // pred_region
      %s1023 = ssub.s32 %s12, 2
      // Predicated region
      $region53: #{cnn_encoder_forward.1} parent=51 // pred_check
        %p1024 = pneg %p172
      $region54: #{cnn_encoder_forward.1} parent=51 // pred_check_branch
        %1026 = sbr.rel (%p1024) target = $region56
      $region55: #{cnn_encoder_forward.1} parent=51 // pred_region
        %p1027 = scmp.lt.s32.totalorder %s18, 1
        %s1028 = scalar_select %p1027, %s18, 1
        %s1029 = smul.addr %s1028, 4
        %s1030 = scalar_lea.vmem %s6, %s1029
      $region56: #{cnn_encoder_forward.1} parent=51 // pred_fallthru
        _
    $region52: #{cnn_encoder_forward.1} parent=5 // pred_fallthru
      _
  $region6: #{cnn_encoder_forward.1} parent=0 // loop_footer
    %s16 = sadd.s32 1, %s12
  $region7: #{cnn_encoder_forward.1} parent=0 // loop_footer_branch
    %11 = sbr.rel target = $region3
  $region8: #{cnn_encoder_forward.1} parent=0 // loop_exit
    _

</llo_original>
